<compile_context>
chip_gen: v5e
topology: v5e:2x2
jax: 0.10.0
libtpu: 0.0.40
codegen_flags: <defaults>
</compile_context>

<pallas_src>
import functools

import jax
import jax.numpy as jnp
from jax.experimental import pallas as pl
from jax.experimental.pallas import tpu as pltpu


FEAT = 512   # encoder feature width expected by the head (nn.Linear(512, ...))
LANE = 128   # TPU lane width; contraction / class dims padded to multiples


def _round_up(x, m):
    return (x + m - 1) // m * m


def _pick_spatial_tile(hw, cap=128):
    """Largest multiple-of-8 divisor of hw that is <= cap (fallback: hw)."""
    t = min(cap, hw)
    while t >= 8:
        if hw % t == 0:
            return t
        t //= 2
    return hw


def merlin_enc_kernel(patches_ref, conv_w_ref, conv_b_ref,
                      head_w_ref, head_b_ref, out_ref, acc_ref, *, inv_hw):
    # patches_ref: (1, THW, Kp) bf16   im2col rows for one (batch, spatial) tile
    # conv_w_ref : (Kp, FEAT)   bf16   conv weight, flattened+transposed+padded
    # conv_b_ref : (1, FEAT)    f32
    # head_w_ref : (FEAT, Cp)   bf16   linear head weight (transposed, padded)
    # head_b_ref : (1, Cp)      f32
    # out_ref    : (1, 1, Cp)   f32    logits for this batch row (padded classes)
    # acc_ref    : (1, FEAT)    f32    running spatial sum of relu(conv)
    t = pl.program_id(1)
    nt = pl.num_programs(1)

    @pl.when(t == 0)
    def _init():
        acc_ref[...] = jnp.zeros_like(acc_ref)

    # Conv-as-matmul on the MXU: bf16 operands, f32 accumulation.
    feat = jnp.dot(patches_ref[0], conv_w_ref[...],
                   preferred_element_type=jnp.float32)        # (THW, FEAT) f32
    feat = jnp.maximum(feat + conv_b_ref[...], 0.0)           # bias + ReLU (f32 VPU)

    # Partial global-average-pool: accumulate the spatial sum for this tile.
    acc_ref[...] += jnp.sum(feat, axis=0, keepdims=True)      # (1, FEAT)

    @pl.when(t == nt - 1)
    def _finalize():
        pooled = acc_ref[...] * inv_hw                        # (1, FEAT) f32
        logits = jnp.dot(pooled.astype(head_w_ref.dtype), head_w_ref[...],
                         preferred_element_type=jnp.float32)  # (1, Cp) f32
        out_ref[0] = (logits + head_b_ref[...]).astype(out_ref.dtype)


def im2col_3x3(x):
    """x: (B, C, H, W) NCHW -> patches (B, H*W, C*9), K ordered (c, kh, kw)."""
    B, C, H, W = x.shape
    xp = jnp.pad(x, ((0, 0), (0, 0), (1, 1), (1, 1)))
    cols = []
    for i in range(3):
        for j in range(3):
            cols.append(xp[:, :, i:i + H, j:j + W])          # (B, C, H, W)
    p = jnp.stack(cols, axis=2)                               # (B, C, 9, H, W)
    p = jnp.transpose(p, (0, 3, 4, 1, 2))                     # (B, H, W, C, 9)
    return p.reshape(B, H * W, C * 9)
    # TODO(synk): for large H,W build the 3x3 patch rows in-kernel from NHWC
    # input (memory_space=pl.ANY + shifted loads) to avoid the 9x HBM blow-up.


def merlin_enc_forward(x, conv_w, conv_b, head_w, head_b):
    """x: (B, Cin, H, W) NCHW.  Returns logits (B, num_classes)."""
    B, Cin, H, W = x.shape
    num_classes = head_w.shape[0]
    HW = H * W
    K = Cin * 9
    Kp = _round_up(K, LANE)                # pad contraction dim to lane width
    Cp = _round_up(num_classes, LANE)      # pad classes for lane-dense output
    THW = _pick_spatial_tile(HW)
    n_t = HW // THW if HW % THW == 0 else 1

    # im2col in the wrapper; emit patches directly in bf16 (halves DMA bytes)
    # and zero-pad K -> Kp (mathematically a no-op for the matmul).
    patches = im2col_3x3(x)                                   # (B, HW, K) f32
    patches = jnp.pad(patches, ((0, 0), (0, 0), (0, Kp - K))).astype(jnp.bfloat16)

    conv_w_mat = conv_w.reshape(FEAT, K).T                    # (K, FEAT)
    conv_w_mat = jnp.pad(conv_w_mat, ((0, Kp - K), (0, 0))).astype(jnp.bfloat16)
    conv_b_mat = conv_b.reshape(1, FEAT).astype(jnp.float32)

    head_w_mat = jnp.pad(head_w.T, ((0, 0), (0, Cp - num_classes))
                         ).astype(jnp.bfloat16)               # (FEAT, Cp)
    head_b_mat = jnp.pad(head_b.reshape(1, num_classes),
                         ((0, 0), (0, Cp - num_classes))).astype(jnp.float32)

    kernel = functools.partial(merlin_enc_kernel, inv_hw=1.0 / float(HW))

    out = pl.pallas_call(
        kernel,
        out_shape=jax.ShapeDtypeStruct((B, 1, Cp), jnp.float32),
        grid=(B, n_t),
        in_specs=[
            pl.BlockSpec((1, THW, Kp), lambda b, t: (b, t, 0)),   # patches tile
            pl.BlockSpec((Kp, FEAT), lambda b, t: (0, 0)),        # conv weight
            pl.BlockSpec((1, FEAT), lambda b, t: (0, 0)),         # conv bias
            pl.BlockSpec((FEAT, Cp), lambda b, t: (0, 0)),        # head weight
            pl.BlockSpec((1, Cp), lambda b, t: (0, 0)),           # head bias
        ],
        out_specs=pl.BlockSpec((1, 1, Cp), lambda b, t: (b, 0, 0)),
        scratch_shapes=[pltpu.VMEM((1, FEAT), jnp.float32)],
        compiler_params=pltpu.CompilerParams(
            dimension_semantics=("parallel", "arbitrary")),
    )(patches, conv_w_mat, conv_b_mat, head_w_mat, head_b_mat)

    return out.reshape(B, Cp)[:, :num_classes]


def reference_forward(x, conv_w, conv_b, head_w, head_b):
    """Pure-JAX reference matching the PyTorch semantics (f32 throughout)."""
    feat = jax.lax.conv_general_dilated(
        x, conv_w, window_strides=(1, 1), padding=((1, 1), (1, 1)),
        dimension_numbers=("NCHW", "OIHW", "NCHW"))
    feat = jnp.maximum(feat + conv_b[None, :, None, None], 0.0)
    pooled = jnp.mean(feat, axis=(2, 3))                      # (B, 512)
    return pooled @ head_w.T + head_b[None, :]


if __name__ == "__main__":
    key = jax.random.PRNGKey(0)
    k1, k2, k3, k4, k5 = jax.random.split(key, 5)

    B, Cin, H, W = 2, 4, 16, 16
    num_classes = 10

    x = jax.random.normal(k1, (B, Cin, H, W), dtype=jnp.float32)
    # Encoder (stand-in for `enc`): Conv2d(Cin, 512, 3, padding=1)
    conv_w = jax.random.normal(k2, (FEAT, Cin, 3, 3), dtype=jnp.float32) * 0.05
    conv_b = jax.random.normal(k3, (FEAT,), dtype=jnp.float32) * 0.05
    # Head: nn.Linear(512, num_classes)  (PyTorch stores weight as (out, in))
    head_w = jax.random.normal(k4, (num_classes, FEAT), dtype=jnp.float32) * 0.05
    head_b = jax.random.normal(k5, (num_classes,), dtype=jnp.float32) * 0.05

    out = merlin_enc_forward(x, conv_w, conv_b, head_w, head_b)
    out = jax.block_until_ready(out)

    ref = reference_forward(x, conv_w, conv_b, head_w, head_b)
    assert out.shape == (B, num_classes)
    # Tolerance widened vs. v1 because MXU operands are deliberately bf16
    # (f32 accumulation); elementwise math stays f32.
    assert jnp.allclose(out, ref, atol=2e-2, rtol=2e-2), (
        f"max abs diff {jnp.max(jnp.abs(out - ref))}")

    # TODO(synk): `return_feature=True` branch (returning (z[0], z[1])) is a
    # pass-through of encoder outputs and is not exercised here.
    print("KERNEL_OK")
</pallas_src>

<mosaic_0001>
module attributes {stable_mosaic.version = 11 : i64} {
  func.func @merlin_enc_kernel(%arg0: i32, %arg1: i32, %arg2: memref<1x128x128xbf16, #tpu.memory_space<vmem>>, %arg3: memref<128x512xbf16, #tpu.memory_space<vmem>>, %arg4: memref<1x512xf32, #tpu.memory_space<vmem>>, %arg5: memref<512x128xbf16, #tpu.memory_space<vmem>>, %arg6: memref<1x128xf32, #tpu.memory_space<vmem>>, %arg7: memref<1x1x128xf32, #tpu.memory_space<vmem>>, %arg8: memref<1x512xf32, #tpu.memory_space<vmem>>) attributes {dimension_semantics = [#tpu.dimension_semantics<parallel>, #tpu.dimension_semantics<arbitrary>], iteration_bounds = array<i64: 2, 2>, scalar_prefetch = 0 : i64, scratch_operands = 1 : i64, tpu.core_type = #tpu.core_type<tc>, window_params = [{transform_indices = @transform_0, window_bounds = array<i64: 1, 128, 128>}, {pipeline_mode = #tpu.pipeline_mode<synchronous>, transform_indices = @transform_1, window_bounds = array<i64: 128, 512>}, {pipeline_mode = #tpu.pipeline_mode<synchronous>, transform_indices = @transform_2, window_bounds = array<i64: 1, 512>}, {pipeline_mode = #tpu.pipeline_mode<synchronous>, transform_indices = @transform_3, window_bounds = array<i64: 512, 128>}, {pipeline_mode = #tpu.pipeline_mode<synchronous>, transform_indices = @transform_4, window_bounds = array<i64: 1, 128>}, {transform_indices = @transform_5, window_bounds = array<i64: 1, 1, 128>}]} {
    %c0_i32 = arith.constant 0 : i32
    %0 = arith.cmpi eq, %arg1, %c0_i32 : i32
    %1 = arith.extui %0 : i1 to i32
    %c0_i32_0 = arith.constant 0 : i32
    %2 = arith.cmpi ne, %1, %c0_i32_0 : i32
    scf.if %2 {
      %cst_14 = arith.constant 0.000000e+00 : f32
      %20 = vector.broadcast %cst_14 : f32 to vector<1x512xf32>
      %c0_15 = arith.constant 0 : index
      %c0_16 = arith.constant 0 : index
      %21 = vector.load %arg8[%c0_15, %c0_16] : memref<1x512xf32, #tpu.memory_space<vmem>>, vector<1x512xf32>
      tpu.vector_store %arg8[%c0_15, %c0_16], %20 {strides = array<i32>} : memref<1x512xf32, #tpu.memory_space<vmem>>, vector<1x512xf32>,
    } else {
    }
    %c0 = arith.constant 0 : index
    %c0_1 = arith.constant 0 : index
    %c0_2 = arith.constant 0 : index
    %3 = vector.load %arg2[%c0, %c0_1, %c0_2] : memref<1x128x128xbf16, #tpu.memory_space<vmem>>, vector<1x128x128xbf16>
    %4 = vector.shape_cast %3 : vector<1x128x128xbf16> to vector<128x128xbf16>
    %c0_3 = arith.constant 0 : index
    %c0_4 = arith.constant 0 : index
    %5 = vector.load %arg3[%c0_3, %c0_4] : memref<128x512xbf16, #tpu.memory_space<vmem>>, vector<128x512xbf16>
    %cst = arith.constant dense<0.000000e+00> : vector<128x512xf32>
    %6 = tpu.matmul %4, %5, %cst {dimension_numbers = #tpu.dot_dimension_numbers<[1], [0], [0], [1], [0, 0, 1, 1], [], []>} : vector<128x128xbf16>, vector<128x512xbf16>, vector<128x512xf32> -> vector<128x512xf32>
    %c0_5 = arith.constant 0 : index
    %c0_6 = arith.constant 0 : index
    %7 = vector.load %arg4[%c0_5, %c0_6] : memref<1x512xf32, #tpu.memory_space<vmem>>, vector<1x512xf32>
    %8 = vector.broadcast %7 : vector<1x512xf32> to vector<128x512xf32>
    %9 = arith.addf %6, %8 : vector<128x512xf32>
    %cst_7 = arith.constant 0.000000e+00 : f32
    %10 = vector.broadcast %cst_7 : f32 to vector<128x512xf32>
    %11 = arith.maximumf %9, %10 : vector<128x512xf32>
    %c0_8 = arith.constant 0 : index
    %c0_9 = arith.constant 0 : index
    %12 = vector.load %arg8[%c0_8, %c0_9] : memref<1x512xf32, #tpu.memory_space<vmem>>, vector<1x512xf32>
    %cst_10 = arith.constant dense<0.000000e+00> : vector<512xf32>
    %13 = vector.multi_reduction <add>, %11, %cst_10 [0] : vector<128x512xf32> to vector<512xf32>
    %14 = vector.shape_cast %13 : vector<512xf32> to vector<1x512xf32>
    %15 = arith.addf %12, %14 : vector<1x512xf32>
    %c0_11 = arith.constant 0 : index
    %c0_12 = arith.constant 0 : index
    %16 = vector.load %arg8[%c0_11, %c0_12] : memref<1x512xf32, #tpu.memory_space<vmem>>, vector<1x512xf32>
    tpu.vector_store %arg8[%c0_11, %c0_12], %15 {strides = array<i32>} : memref<1x512xf32, #tpu.memory_space<vmem>>, vector<1x512xf32>,
    %c1_i32 = arith.constant 1 : i32
    %17 = arith.cmpi eq, %arg1, %c1_i32 : i32
    %18 = arith.extui %17 : i1 to i32
    %c0_i32_13 = arith.constant 0 : i32
    %19 = arith.cmpi ne, %18, %c0_i32_13 : i32
    scf.if %19 {
      %c0_14 = arith.constant 0 : index
      %c0_15 = arith.constant 0 : index
      %20 = vector.load %arg8[%c0_14, %c0_15] : memref<1x512xf32, #tpu.memory_space<vmem>>, vector<1x512xf32>
      %cst_16 = arith.constant 3.906250e-03 : f32
      %21 = vector.broadcast %cst_16 : f32 to vector<1x512xf32>
      %22 = arith.mulf %20, %21 : vector<1x512xf32>
      %23 = arith.truncf %22 : vector<1x512xf32> to vector<1x512xbf16>
      %c0_17 = arith.constant 0 : index
      %c0_18 = arith.constant 0 : index
      %24 = vector.load %arg5[%c0_17, %c0_18] : memref<512x128xbf16, #tpu.memory_space<vmem>>, vector<512x128xbf16>
      %cst_19 = arith.constant dense<0.000000e+00> : vector<1x128xf32>
      %25 = tpu.matmul %23, %24, %cst_19 {dimension_numbers = #tpu.dot_dimension_numbers<[1], [0], [0], [1], [0, 0, 1, 1], [], []>} : vector<1x512xbf16>, vector<512x128xbf16>, vector<1x128xf32> -> vector<1x128xf32>
      %c0_20 = arith.constant 0 : index
      %c0_21 = arith.constant 0 : index
      %26 = vector.load %arg6[%c0_20, %c0_21] : memref<1x128xf32, #tpu.memory_space<vmem>>, vector<1x128xf32>
      %27 = arith.addf %25, %26 : vector<1x128xf32>
      %c0_22 = arith.constant 0 : index
      %c0_23 = arith.constant 0 : index
      %c0_24 = arith.constant 0 : index
      %28 = vector.load %arg7[%c0_22, %c0_23, %c0_24] : memref<1x1x128xf32, #tpu.memory_space<vmem>>, vector<1x1x128xf32>
      %29 = vector.shape_cast %28 : vector<1x1x128xf32> to vector<1x128xf32>
      %30 = vector.shape_cast %27 : vector<1x128xf32> to vector<1x1x128xf32>
      tpu.vector_store %arg7[%c0_22, %c0_23, %c0_24], %30 {strides = array<i32>} : memref<1x1x128xf32, #tpu.memory_space<vmem>>, vector<1x1x128xf32>,
    } else {
    }
    return
  }
  func.func @transform_0(%arg0: i32, %arg1: i32) -> (i32, i32, i32) {
    %c0_i32 = arith.constant 0 : i32
    %c0_i32_0 = arith.constant 0 : i32
    return %arg0, %arg1, %c0_i32 : i32, i32, i32
  }
  func.func @transform_1(%arg0: i32, %arg1: i32) -> (i32, i32) {
    %c0_i32 = arith.constant 0 : i32
    %c0_i32_0 = arith.constant 0 : i32
    %c0_i32_1 = arith.constant 0 : i32
    return %c0_i32, %c0_i32_0 : i32, i32
  }
  func.func @transform_2(%arg0: i32, %arg1: i32) -> (i32, i32) {
    %c0_i32 = arith.constant 0 : i32
    %c0_i32_0 = arith.constant 0 : i32
    %c0_i32_1 = arith.constant 0 : i32
    return %c0_i32, %c0_i32_0 : i32, i32
  }
  func.func @transform_3(%arg0: i32, %arg1: i32) -> (i32, i32) {
    %c0_i32 = arith.constant 0 : i32
    %c0_i32_0 = arith.constant 0 : i32
    %c0_i32_1 = arith.constant 0 : i32
    return %c0_i32, %c0_i32_0 : i32, i32
  }
  func.func @transform_4(%arg0: i32, %arg1: i32) -> (i32, i32) {
    %c0_i32 = arith.constant 0 : i32
    %c0_i32_0 = arith.constant 0 : i32
    %c0_i32_1 = arith.constant 0 : i32
    return %c0_i32, %c0_i32_0 : i32, i32
  }
  func.func @transform_5(%arg0: i32, %arg1: i32) -> (i32, i32, i32) {
    %c0_i32 = arith.constant 0 : i32
    %c0_i32_0 = arith.constant 0 : i32
    %c0_i32_1 = arith.constant 0 : i32
    return %arg0, %c0_i32, %c0_i32_0 : i32, i32, i32
  }
}

</mosaic_0001>

<llo_original>
// kernel: tpu_custom_call.1
$region0: #{tpu_custom_call.1}
  #allocation0 [shape = 'u32[]', space=smem, size = 0x4, offset = 0x4, fixed_abs, tag = 'smem constant byte address 0x4 - core index']
  #allocation1 [shape = 'u32[72,128]{1,0:T(1,128)}', space=vmem, size = 0x9000, scoped, tag = 'internal scratch']
  #allocation2 [shape = 'f32[1,512]{1,0:T(1,128)}', space=vmem, size = 0x800, scoped, tag = 'scratch operand']
  %s0 = inlined_call_operand.hbm [shape: bf16[2,256,128], index: 0, kind: input, shape index: {}]
  %s1 = inlined_call_operand.hbm [shape: bf16[128,512], index: 1, kind: input, shape index: {}]
  %s2 = inlined_call_operand.hbm [shape: f32[1,512], index: 2, kind: input, shape index: {}]
  %s3 = inlined_call_operand.hbm [shape: bf16[512,128], index: 3, kind: input, shape index: {}]
  %s4 = inlined_call_operand.vmem [shape: f32[1,128], index: 4, kind: input, shape index: {}]
  %s5 = inlined_call_operand.hbm [shape: f32[2,1,128], index: 5, kind: output, shape index: {}]
  %s6 = sld [smem:[#allocation0]]
  $region77: #{tpu_custom_call.1} parent=0
    _
  %s8 = ssub.s32 1, %s6
  %s9 = scalar_select 0, %s8, %s6
  $region1: #{tpu_custom_call.1} parent=0
    #allocation3 [shape = 'u8[65536]{0}', space=vmem, size = 0x10000, scoped, tag = 'input window, operand 0']
    #allocation4 [shape = 's32[2]{0}', space=sflag, size = 0x8, scoped, tag = 'scoped memory for tpu_custom_call.1']
    #allocation5 [shape = 's32[2]{0}', space=sflag, size = 0x8, scoped, tag = 'scoped memory for tpu_custom_call.1']
    #allocation6 [shape = 'u8[131072]{0}', space=vmem, size = 0x20000, scoped, tag = 'input window, operand 1, single buffered']
    #allocation7 [shape = 's32[1]{0}', space=sflag, size = 0x4, scoped, tag = 'scoped memory for tpu_custom_call.1']
    #allocation8 [shape = 'u8[2048]{0}', space=vmem, size = 0x800, scoped, tag = 'input window, operand 2, single buffered']
    #allocation9 [shape = 'u8[131072]{0}', space=vmem, size = 0x20000, scoped, tag = 'input window, operand 3, single buffered']
    #allocation10 [shape = 's32[1]{0}', space=sflag, size = 0x4, scoped, tag = 'scoped memory for tpu_custom_call.1']
    #allocation11 [shape = 'u8[1024]{0}', space=vmem, size = 0x400, scoped, tag = 'output window, operand 0']
    %10 = vsyncpa [#allocation4], 0
    %s11 = scalar_lea.sflag [#allocation4], 1
    %12 = vsyncpa %s11, 0
    %13 = vsyncpa [#allocation7], 0
    %14 = vsyncpa [#allocation10], 0
    %15 = vsyncpa [#allocation5], 0
    %s16 = scalar_lea.sflag [#allocation5], 1
    %17 = vsyncpa %s16, 0
    loop: start=0, step=1, limit=6
    $region2: #{tpu_custom_call.1} parent=1 // loop_pre_header
      _
    $region3: #{tpu_custom_call.1} parent=1 // loop_header
      %s19 = sphi 0, %s23
      %p20 = scmp.ge.s32.totalorder %s19, 6
      %s26 = sphi 0, %s38
      %s27 = sphi 0, %s34
      %s28 = sphi 0, %s26
      %s29 = sphi 0, %s27
      %s30 = sphi 0, %s28
      %s31 = sphi 0, %s29
      %s43 = sphi 0, %s45
      %s46 = sphi 0, %s43
      %s47 = sphi 0, %s46
      %s63 = sphi 0, %s47
      %s67 = sphi 0, %s67
      %s69 = sphi 0, %s67
      %s70 = sphi 0, %s69
      %s84 = sphi 0, %s70
      %s88 = sphi 0, %s88
      %s90 = sphi 0, %s88
      %s91 = sphi 0, %s90
      %s105 = sphi 0, %s91
      %s109 = sphi 0, %s109
      %s111 = sphi 0, %s109
      %s112 = sphi 0, %s111
      %s126 = sphi 0, %s112
      %s130 = sphi 0, %s130
      %s132 = sphi 0, %s130
      %s133 = sphi 0, %s132
      %s147 = sphi 0, %s133
      %s153 = sphi 0, %s155
      %s156 = sphi 0, %s153
      %s157 = sphi 0, %s156
      %s173 = sphi 0, %s157
    $region4: #{tpu_custom_call.1} parent=1 // loop_header_branch
      %22 = sbr.rel (%p20) target = $region8
    $region5: #{tpu_custom_call.1} parent=1 // loop_body
      %s24 = ssub.s32 %s19, 1
      %s25 = ssub.s32 %s19, 2
      %s32 = sadd.s32 1, %s27
      %p33 = scmp.ge.s32.totalorder %s32, 2
      %s34 = scalar_select %p33, 0, %s32
      %s35 = sadd.s32 1, %s26
      %s36 = scalar_select %p33, %s35, %s26
      %p37 = scmp.ge.s32.totalorder %s36, 2
      %s38 = scalar_select %p37, 0, %s36
      %s39 = ssub.s32 %s26, %s38
      %s40 = ssub.s32 %s27, %s34
      %s41 = sor.u32 %s39, %s40
      %p42 = scmp.eq.s32.totalorder %s41, 0
      %s44 = sadd.s32 %s43, 1
      %s45 = scalar_select %p42, %s43, %s44
      %p48 = pneg %p42
      %p49 = scmp.eq.s32.totalorder %s19, 3
      %p50 = por %p48, %p49
      %p51 = scmp.ne.s32.totalorder %s43, %s46
      %p52 = scmp.eq.s32.totalorder %s19, 0
      %p53 = por %p51, %p52
      %p54 = scmp.ne.s32.totalorder %s43, %s46
      %p55 = scmp.eq.s32.totalorder %s24, 3
      %p56 = por %p54, %p55
      %p57 = scmp.ne.s32.totalorder %s46, %s47
      %p58 = scmp.eq.s32.totalorder %s24, 0
      %p59 = por %p57, %p58
      %p60 = scmp.ne.s32.totalorder %s46, %s47
      %p61 = scmp.eq.s32.totalorder %s25, 3
      %p62 = por %p60, %p61
      %p64 = scmp.ne.s32.totalorder %s47, %s63
      %p65 = scmp.eq.s32.totalorder %s25, 0
      %p66 = por %p64, %p65
      %s68 = sadd.s32 %s67, 1
      %p71 = scmp.eq.s32.totalorder %s19, 3
      %p72 = scmp.ne.s32.totalorder %s67, %s69
      %p73 = scmp.eq.s32.totalorder %s19, 0
      %p74 = por %p72, %p73
      %p75 = scmp.ne.s32.totalorder %s67, %s69
      %p76 = scmp.eq.s32.totalorder %s24, 3
      %p77 = por %p75, %p76
      %p78 = scmp.ne.s32.totalorder %s69, %s70
      %p79 = scmp.eq.s32.totalorder %s24, 0
      %p80 = por %p78, %p79
      %p81 = scmp.ne.s32.totalorder %s69, %s70
      %p82 = scmp.eq.s32.totalorder %s25, 3
      %p83 = por %p81, %p82
      %p85 = scmp.ne.s32.totalorder %s70, %s84
      %p86 = scmp.eq.s32.totalorder %s25, 0
      %p87 = por %p85, %p86
      %s89 = sadd.s32 %s88, 1
      %p92 = scmp.eq.s32.totalorder %s19, 3
      %p93 = scmp.ne.s32.totalorder %s88, %s90
      %p94 = scmp.eq.s32.totalorder %s19, 0
      %p95 = por %p93, %p94
      %p96 = scmp.ne.s32.totalorder %s88, %s90
      %p97 = scmp.eq.s32.totalorder %s24, 3
      %p98 = por %p96, %p97
      %p99 = scmp.ne.s32.totalorder %s90, %s91
      %p100 = scmp.eq.s32.totalorder %s24, 0
      %p101 = por %p99, %p100
      %p102 = scmp.ne.s32.totalorder %s90, %s91
      %p103 = scmp.eq.s32.totalorder %s25, 3
      %p104 = por %p102, %p103
      %p106 = scmp.ne.s32.totalorder %s91, %s105
      %p107 = scmp.eq.s32.totalorder %s25, 0
      %p108 = por %p106, %p107
      %s110 = sadd.s32 %s109, 1
      %p113 = scmp.eq.s32.totalorder %s19, 3
      %p114 = scmp.ne.s32.totalorder %s109, %s111
      %p115 = scmp.eq.s32.totalorder %s19, 0
      %p116 = por %p114, %p115
      %p117 = scmp.ne.s32.totalorder %s109, %s111
      %p118 = scmp.eq.s32.totalorder %s24, 3
      %p119 = por %p117, %p118
      %p120 = scmp.ne.s32.totalorder %s111, %s112
      %p121 = scmp.eq.s32.totalorder %s24, 0
      %p122 = por %p120, %p121
      %p123 = scmp.ne.s32.totalorder %s111, %s112
      %p124 = scmp.eq.s32.totalorder %s25, 3
      %p125 = por %p123, %p124
      %p127 = scmp.ne.s32.totalorder %s112, %s126
      %p128 = scmp.eq.s32.totalorder %s25, 0
      %p129 = por %p127, %p128
      %s131 = sadd.s32 %s130, 1
      %p134 = scmp.eq.s32.totalorder %s19, 3
      %p135 = scmp.ne.s32.totalorder %s130, %s132
      %p136 = scmp.eq.s32.totalorder %s19, 0
      %p137 = por %p135, %p136
      %p138 = scmp.ne.s32.totalorder %s130, %s132
      %p139 = scmp.eq.s32.totalorder %s24, 3
      %p140 = por %p138, %p139
      %p141 = scmp.ne.s32.totalorder %s132, %s133
      %p142 = scmp.eq.s32.totalorder %s24, 0
      %p143 = por %p141, %p142
      %p144 = scmp.ne.s32.totalorder %s132, %s133
      %p145 = scmp.eq.s32.totalorder %s25, 3
      %p146 = por %p144, %p145
      %p148 = scmp.ne.s32.totalorder %s133, %s147
      %p149 = scmp.eq.s32.totalorder %s25, 0
      %p150 = por %p148, %p149
      %s151 = ssub.s32 %s26, %s38
      %p152 = scmp.eq.s32.totalorder %s151, 0
      %s154 = sadd.s32 %s153, 1
      %s155 = scalar_select %p152, %s153, %s154
      %p158 = pneg %p152
      %p159 = scmp.eq.s32.totalorder %s19, 3
      %p160 = por %p158, %p159
      %p161 = scmp.ne.s32.totalorder %s153, %s156
      %p162 = scmp.eq.s32.totalorder %s19, 0
      %p163 = por %p161, %p162
      %p164 = scmp.ne.s32.totalorder %s153, %s156
      %p165 = scmp.eq.s32.totalorder %s24, 3
      %p166 = por %p164, %p165
      %p167 = scmp.ne.s32.totalorder %s156, %s157
      %p168 = scmp.eq.s32.totalorder %s24, 0
      %p169 = por %p167, %p168
      %p170 = scmp.ne.s32.totalorder %s156, %s157
      %p171 = scmp.eq.s32.totalorder %s25, 3
      %p172 = por %p170, %p171
      %p174 = scmp.ne.s32.totalorder %s157, %s173
      %p175 = scmp.eq.s32.totalorder %s25, 0
      %p176 = por %p174, %p175
      %p177 = scmp.le.s32.totalorder 1, %s19
      %p178 = scmp.lt.s32.totalorder %s19, 5
      %p179 = pnand %p177, %p178
      %p180 = pneg %p179
      // Predicated region
      $region9: #{tpu_custom_call.1} parent=5 // pred_check
        _
      $region10: #{tpu_custom_call.1} parent=5 // pred_check_branch
        %182 = sbr.rel (%p179) target = $region12
      $region11: #{tpu_custom_call.1} parent=5 // pred_region
        %s183 = ssub.s32 %s19, 1
        // Predicated region
        $region13: #{tpu_custom_call.1} parent=11 // pred_check
          %p184 = pneg %p80
        $region14: #{tpu_custom_call.1} parent=11 // pred_check_branch
          %186 = sbr.rel (%p184) target = $region16
        $region15: #{tpu_custom_call.1} parent=11 // pred_region
          %188 = vsyncadd [#allocation7], 0
          %s189 = sshll.u32 %s1, 4
          %s190 = int_to_ptr.hbm [resolvable:$true] %s189
          %s191 = sshll.u32 [#allocation6], 4
          %s192 = int_to_ptr.vmem [resolvable:$true] %s191
          %197 = dma.hbm_to_vmem [thread:$0]  %s190, 4096, %s192, [#allocation7], 256, 256, 16
        $region16: #{tpu_custom_call.1} parent=11 // pred_fallthru
          _
        // Predicated region
        $region17: #{tpu_custom_call.1} parent=11 // pred_check
          %p198 = pneg %p101
        $region18: #{tpu_custom_call.1} parent=11 // pred_check_branch
          %200 = sbr.rel (%p198) target = $region20
        $region19: #{tpu_custom_call.1} parent=11 // pred_region
          %202 = vsyncadd [#allocation7], 0
          %s204 = sshll.u32 %s2, 4
          %s205 = int_to_ptr.hbm [resolvable:$true] %s204
          %s206 = sshll.u32 [#allocation8], 4
          %s207 = int_to_ptr.vmem [resolvable:$true] %s206
          %209 = dma.hbm_to_vmem [thread:$0]  %s205, 64, %s207, [#allocation7]
        $region20: #{tpu_custom_call.1} parent=11 // pred_fallthru
          _
        // Predicated region
        $region21: #{tpu_custom_call.1} parent=11 // pred_check
          %p210 = pneg %p122
        $region22: #{tpu_custom_call.1} parent=11 // pred_check_branch
          %212 = sbr.rel (%p210) target = $region24
        $region23: #{tpu_custom_call.1} parent=11 // pred_region
          %214 = vsyncadd [#allocation10], 0
          %s215 = sshll.u32 %s3, 4
          %s216 = int_to_ptr.hbm [resolvable:$true] %s215
          %s217 = sshll.u32 [#allocation9], 4
          %s218 = int_to_ptr.vmem [resolvable:$true] %s217
          %223 = dma.hbm_to_vmem [thread:$0]  %s216, 4096, %s218, [#allocation10], 64, 64, 4
        $region24: #{tpu_custom_call.1} parent=11 // pred_fallthru
          _
        // Predicated region
        $region25: #{tpu_custom_call.1} parent=11 // pred_check
          %p224 = pneg %p143
        $region26: #{tpu_custom_call.1} parent=11 // pred_check_branch
          %226 = sbr.rel (%p224) target = $region28
        $region27: #{tpu_custom_call.1} parent=11 // pred_region
          _
        $region28: #{tpu_custom_call.1} parent=11 // pred_fallthru
          _
      $region12: #{tpu_custom_call.1} parent=5 // pred_fallthru
        _
      %p227 = scmp.lt.s32.totalorder %s19, 4
      // Predicated region
      $region29: #{tpu_custom_call.1} parent=5 // pred_check
        %p228 = pneg %p227
      $region30: #{tpu_custom_call.1} parent=5 // pred_check_branch
        %230 = sbr.rel (%p228) target = $region32
      $region31: #{tpu_custom_call.1} parent=5 // pred_region
        // Predicated region
        $region33: #{tpu_custom_call.1} parent=31 // pred_check
          %p231 = pneg %p53
        $region34: #{tpu_custom_call.1} parent=31 // pred_check_branch
          %233 = sbr.rel (%p231) target = $region36
        $region35: #{tpu_custom_call.1} parent=31 // pred_region
          %s234 = sand.u32 %s43, 1
          %s235 = scalar_lea.sflag [#allocation4], %s234
          %s236 = sand.u32 %s43, 1
          %s237 = smul.addr %s236, 64
          %s238 = scalar_lea.vmem [#allocation3], %s237
          %s239 = smul.u32 16, %s27
          %241 = vsyncadd %s235, 0
          %s242 = smul.addr %s26, 32
          %s243 = sadd.s32 %s239, %s242
          %s244 = smul.addr %s243, 4
          %s245 = scalar_lea.hbm %s0, %s244
          %s246 = sshll.u32 %s245, 4
          %s247 = int_to_ptr.hbm [resolvable:$true] %s246
          %s248 = sshll.u32 %s238, 4
          %s249 = int_to_ptr.vmem [resolvable:$true] %s248
          %254 = dma.hbm_to_vmem [thread:$0]  %s247, 1024, %s249, %s235, 64, 64, 4
        $region36: #{tpu_custom_call.1} parent=31 // pred_fallthru
          _
      $region32: #{tpu_custom_call.1} parent=5 // pred_fallthru
        _
      %p255 = scmp.le.s32.totalorder 1, %s19
      %p256 = scmp.lt.s32.totalorder %s19, 5
      %p257 = pnand %p255, %p256
      %p258 = pneg %p257
      // Predicated region
      $region37: #{tpu_custom_call.1} parent=5 // pred_check
        _
      $region38: #{tpu_custom_call.1} parent=5 // pred_check_branch
        %260 = sbr.rel (%p257) target = $region40
      $region39: #{tpu_custom_call.1} parent=5 // pred_region
        %s261 = ssub.s32 %s19, 1
        %s262 = sand.u32 %s46, 1
        %s263 = scalar_lea.sflag [#allocation4], %s262
        %s264 = sand.u32 %s46, 1
        %s265 = smul.addr %s264, 64
        %s266 = scalar_lea.vmem [#allocation3], %s265
        // Predicated region
        $region41: #{tpu_custom_call.1} parent=39 // pred_check
          %p267 = pneg %p59
        $region42: #{tpu_custom_call.1} parent=39 // pred_check_branch
          %269 = sbr.rel (%p267) target = $region44
        $region43: #{tpu_custom_call.1} parent=39 // pred_region
          %271 = dma.done %s263, 1024
        $region44: #{tpu_custom_call.1} parent=39 // pred_fallthru
          _
        // Predicated region
        $region45: #{tpu_custom_call.1} parent=39 // pred_check
          %p272 = pneg %p80
        $region46: #{tpu_custom_call.1} parent=39 // pred_check_branch
          %274 = sbr.rel (%p272) target = $region48
        $region47: #{tpu_custom_call.1} parent=39 // pred_region
          %276 = dma.done [#allocation7], 4096
        $region48: #{tpu_custom_call.1} parent=39 // pred_fallthru
          _
        // Predicated region
        $region49: #{tpu_custom_call.1} parent=39 // pred_check
          %p277 = pneg %p101
        $region50: #{tpu_custom_call.1} parent=39 // pred_check_branch
          %279 = sbr.rel (%p277) target = $region52
        $region51: #{tpu_custom_call.1} parent=39 // pred_region
          %281 = dma.done [#allocation7], 64
        $region52: #{tpu_custom_call.1} parent=39 // pred_fallthru
          _
        // Predicated region
        $region53: #{tpu_custom_call.1} parent=39 // pred_check
          %p282 = pneg %p122
        $region54: #{tpu_custom_call.1} parent=39 // pred_check_branch
          %284 = sbr.rel (%p282) target = $region56
        $region55: #{tpu_custom_call.1} parent=39 // pred_region
          %286 = dma.done [#allocation10], 4096
        $region56: #{tpu_custom_call.1} parent=39 // pred_fallthru
          _
        %s287 = sand.u32 %s46, 1
        %s288 = scalar_lea.sflag [#allocation4], %s287
        %s289 = sand.u32 %s46, 1
        %s290 = smul.addr %s289, 64
        %s291 = scalar_lea.vmem [#allocation3], %s290
        %p292 = pneg %p59
        %p293 = pneg %p56
        %p294 = pneg %p80
        %p295 = pneg %p77
        %p296 = pneg %p101
        %p297 = pneg %p98
        %p298 = pneg %p122
        %p299 = pneg %p119
        %p300 = pneg %p143
        %p301 = pneg %p140
        %p302 = pneg %p169
        %p303 = pneg %p166
        %s304 = sand.u32 %s156, 1
        %s305 = scalar_lea.sflag [#allocation5], %s304
        %s306 = sand.u32 %s156, 1
        %s307 = scalar_lea.vmem [#allocation11], %s306
        %s308 = smul.u32 16, %s29
        %p309 = scmp.eq.s32.totalorder %s29, 0
        // Predicated region
        $region57: #{tpu_custom_call.1} parent=39 // pred_check
          %p310 = pneg %p309
        $region58: #{tpu_custom_call.1} parent=39 // pred_check_branch
          %312 = sbr.rel (%p310) target = $region60
        $region59: #{tpu_custom_call.1} parent=39 // pred_region
          %v313 = vlaneseq
          %vm314 = vcmp.ge.s32.totalorder %v313, 0
          %vm315 = vcmp.lt.s32.totalorder %v313, 512
          %vm316 = vmand %vm314, %vm315
          %317 = vst.msk [vmem:[#allocation2] sm:$0xf] %vm316, 0.0
        $region60: #{tpu_custom_call.1} parent=39 // pred_fallthru
          _
        %v318 = vld [vmem:[%s266] sm:$0xf]
        %v319 = vld [vmem:[%s266 + $0x4] sm:$0xf]
        %v320 = vld [vmem:[%s266 + $0x8] sm:$0xf]
        %v321 = vld [vmem:[%s266 + $0xc] sm:$0xf]
        %v322 = vld [vmem:[%s266 + $0x10] sm:$0xf]
        %v323 = vld [vmem:[%s266 + $0x14] sm:$0xf]
        %v324 = vld [vmem:[%s266 + $0x18] sm:$0xf]
        %v325 = vld [vmem:[%s266 + $0x1c] sm:$0xf]
        %v326 = vld [vmem:[%s266 + $0x20] sm:$0xf]
        %v327 = vld [vmem:[%s266 + $0x24] sm:$0xf]
        %v328 = vld [vmem:[%s266 + $0x28] sm:$0xf]
        %v329 = vld [vmem:[%s266 + $0x2c] sm:$0xf]
        %v330 = vld [vmem:[%s266 + $0x30] sm:$0xf]
        %v331 = vld [vmem:[%s266 + $0x34] sm:$0xf]
        %v332 = vld [vmem:[%s266 + $0x38] sm:$0xf]
        %v333 = vld [vmem:[%s266 + $0x3c] sm:$0xf]
        %v334 = vld [vmem:[#allocation6] sm:$0xff]
        %v335 = vld [vmem:[#allocation6 + $0x8] sm:$0xff]
        %v336 = vld [vmem:[#allocation6 + $0x10] sm:$0xff]
        %v337 = vld [vmem:[#allocation6 + $0x18] sm:$0xff]
        %v338 = vld [vmem:[#allocation6 + $0x20] sm:$0xff]
        %v339 = vld [vmem:[#allocation6 + $0x28] sm:$0xff]
        %v340 = vld [vmem:[#allocation6 + $0x30] sm:$0xff]
        %v341 = vld [vmem:[#allocation6 + $0x38] sm:$0xff]
        %v342 = vld [vmem:[#allocation6 + $0x40] sm:$0xff]
        %v343 = vld [vmem:[#allocation6 + $0x48] sm:$0xff]
        %v344 = vld [vmem:[#allocation6 + $0x50] sm:$0xff]
        %v345 = vld [vmem:[#allocation6 + $0x58] sm:$0xff]
        %v346 = vld [vmem:[#allocation6 + $0x60] sm:$0xff]
        %v347 = vld [vmem:[#allocation6 + $0x68] sm:$0xff]
        %v348 = vld [vmem:[#allocation6 + $0x70] sm:$0xff]
        %v349 = vld [vmem:[#allocation6 + $0x78] sm:$0xff]
        %v350 = vld [vmem:[#allocation6 + $0x80] sm:$0xff]
        %v351 = vld [vmem:[#allocation6 + $0x88] sm:$0xff]
        %v352 = vld [vmem:[#allocation6 + $0x90] sm:$0xff]
        %v353 = vld [vmem:[#allocation6 + $0x98] sm:$0xff]
        %v354 = vld [vmem:[#allocation6 + $0xa0] sm:$0xff]
        %v355 = vld [vmem:[#allocation6 + $0xa8] sm:$0xff]
        %v356 = vld [vmem:[#allocation6 + $0xb0] sm:$0xff]
        %v357 = vld [vmem:[#allocation6 + $0xb8] sm:$0xff]
        %v358 = vld [vmem:[#allocation6 + $0xc0] sm:$0xff]
        %v359 = vld [vmem:[#allocation6 + $0xc8] sm:$0xff]
        %v360 = vld [vmem:[#allocation6 + $0xd0] sm:$0xff]
        %v361 = vld [vmem:[#allocation6 + $0xd8] sm:$0xff]
        %v362 = vld [vmem:[#allocation6 + $0xe0] sm:$0xff]
        %v363 = vld [vmem:[#allocation6 + $0xe8] sm:$0xff]
        %v364 = vld [vmem:[#allocation6 + $0xf0] sm:$0xff]
        %v365 = vld [vmem:[#allocation6 + $0xf8] sm:$0xff]
        %v366 = vld [vmem:[#allocation8] sm:$0xf]
        %v368 = vperm.slane %v366, 0
        %v369 = vperm.slane %v366, 1
        %v370 = vperm.slane %v366, 2
        %v371 = vperm.slane %v366, 3
        %v392 = vunpack.c.l.b16 %v318
        %v393 = vunpack.c.l.b16 %v319
        %v394 = vunpack.c.l.b16 %v320
        %v395 = vunpack.c.l.b16 %v321
        %v396 = vunpack.c.l.b16 %v322
        %v397 = vunpack.c.l.b16 %v323
        %v398 = vunpack.c.l.b16 %v324
        %v399 = vunpack.c.l.b16 %v325
        %v400 = vunpack.c.l.b16 %v326
        %v401 = vunpack.c.l.b16 %v327
        %v402 = vunpack.c.l.b16 %v328
        %v403 = vunpack.c.l.b16 %v329
        %v404 = vunpack.c.l.b16 %v330
        %v405 = vunpack.c.l.b16 %v331
        %v406 = vunpack.c.l.b16 %v332
        %v407 = vunpack.c.l.b16 %v333
        %v408 = vpack.c.b16 %v393, %v392
        %v409 = vpack.c.b16 %v395, %v394
        %v410 = vpack.c.b16 %v397, %v396
        %v411 = vpack.c.b16 %v399, %v398
        %v412 = vpack.c.b16 %v401, %v400
        %v413 = vpack.c.b16 %v403, %v402
        %v414 = vpack.c.b16 %v405, %v404
        %v415 = vpack.c.b16 %v407, %v406
        %v456 = vunpack.c.l.b16 %v334
        %v457 = vunpack.c.h.b16 %v334
        %v458 = vunpack.c.l.b16 %v335
        %v459 = vunpack.c.h.b16 %v335
        %v460 = vunpack.c.l.b16 %v336
        %v461 = vunpack.c.h.b16 %v336
        %v462 = vunpack.c.l.b16 %v337
        %v463 = vunpack.c.h.b16 %v337
        %v464 = vunpack.c.l.b16 %v338
        %v465 = vunpack.c.h.b16 %v338
        %v466 = vunpack.c.l.b16 %v339
        %v467 = vunpack.c.h.b16 %v339
        %v468 = vunpack.c.l.b16 %v340
        %v469 = vunpack.c.h.b16 %v340
        %v470 = vunpack.c.l.b16 %v341
        %v471 = vunpack.c.h.b16 %v341
        %v472 = vunpack.c.l.b16 %v342
        %v473 = vunpack.c.h.b16 %v342
        %v474 = vunpack.c.l.b16 %v343
        %v475 = vunpack.c.h.b16 %v343
        %v476 = vunpack.c.l.b16 %v344
        %v477 = vunpack.c.h.b16 %v344
        %v478 = vunpack.c.l.b16 %v345
        %v479 = vunpack.c.h.b16 %v345
        %v480 = vunpack.c.l.b16 %v346
        %v481 = vunpack.c.h.b16 %v346
        %v482 = vunpack.c.l.b16 %v347
        %v483 = vunpack.c.h.b16 %v347
        %v484 = vunpack.c.l.b16 %v348
        %v485 = vunpack.c.h.b16 %v348
        %v486 = vunpack.c.l.b16 %v349
        %v487 = vunpack.c.h.b16 %v349
        %v488 = vunpack.c.l.b16 %v350
        %v489 = vunpack.c.h.b16 %v350
        %v490 = vunpack.c.l.b16 %v351
        %v491 = vunpack.c.h.b16 %v351
        %v492 = vunpack.c.l.b16 %v352
        %v493 = vunpack.c.h.b16 %v352
        %v494 = vunpack.c.l.b16 %v353
        %v495 = vunpack.c.h.b16 %v353
        %v496 = vunpack.c.l.b16 %v354
        %v497 = vunpack.c.h.b16 %v354
        %v498 = vunpack.c.l.b16 %v355
        %v499 = vunpack.c.h.b16 %v355
        %v500 = vunpack.c.l.b16 %v356
        %v501 = vunpack.c.h.b16 %v356
        %v502 = vunpack.c.l.b16 %v357
        %v503 = vunpack.c.h.b16 %v357
        %v504 = vunpack.c.l.b16 %v358
        %v505 = vunpack.c.h.b16 %v358
        %v506 = vunpack.c.l.b16 %v359
        %v507 = vunpack.c.h.b16 %v359
        %v508 = vunpack.c.l.b16 %v360
        %v509 = vunpack.c.h.b16 %v360
        %v510 = vunpack.c.l.b16 %v361
        %v511 = vunpack.c.h.b16 %v361
        %v512 = vunpack.c.l.b16 %v362
        %v513 = vunpack.c.h.b16 %v362
        %v514 = vunpack.c.l.b16 %v363
        %v515 = vunpack.c.h.b16 %v363
        %v516 = vunpack.c.l.b16 %v364
        %v517 = vunpack.c.h.b16 %v364
        %v518 = vunpack.c.l.b16 %v365
        %v519 = vunpack.c.h.b16 %v365
        %v520 = vpack.c.b16 %v460, %v456
        %v521 = vpack.c.b16 %v461, %v457
        %v522 = vpack.c.b16 %v462, %v458
        %v523 = vpack.c.b16 %v463, %v459
        %v524 = vpack.c.b16 %v468, %v464
        %v525 = vpack.c.b16 %v469, %v465
        %v526 = vpack.c.b16 %v470, %v466
        %v527 = vpack.c.b16 %v471, %v467
        %v528 = vpack.c.b16 %v476, %v472
        %v529 = vpack.c.b16 %v477, %v473
        %v530 = vpack.c.b16 %v478, %v474
        %v531 = vpack.c.b16 %v479, %v475
        %v532 = vpack.c.b16 %v484, %v480
        %v533 = vpack.c.b16 %v485, %v481
        %v534 = vpack.c.b16 %v486, %v482
        %v535 = vpack.c.b16 %v487, %v483
        %v536 = vpack.c.b16 %v492, %v488
        %v537 = vpack.c.b16 %v493, %v489
        %v538 = vpack.c.b16 %v494, %v490
        %v539 = vpack.c.b16 %v495, %v491
        %v540 = vpack.c.b16 %v500, %v496
        %v541 = vpack.c.b16 %v501, %v497
        %v542 = vpack.c.b16 %v502, %v498
        %v543 = vpack.c.b16 %v503, %v499
        %v544 = vpack.c.b16 %v508, %v504
        %v545 = vpack.c.b16 %v509, %v505
        %v546 = vpack.c.b16 %v510, %v506
        %v547 = vpack.c.b16 %v511, %v507
        %v548 = vpack.c.b16 %v516, %v512
        %v549 = vpack.c.b16 %v517, %v513
        %v550 = vpack.c.b16 %v518, %v514
        %v551 = vpack.c.b16 %v519, %v515
        %584 = vmatpush.bf16.msra.mxu0 %v548
        %585 = vmatpush.bf16.msra.mxu0 %v544
        %586 = vmatpush.bf16.msra.mxu0 %v540
        %587 = vmatpush.bf16.msra.mxu0 %v536
        %588 = vmatpush.bf16.msra.mxu0 %v532
        %589 = vmatpush.bf16.msra.mxu0 %v528
        %590 = vmatpush.bf16.msra.mxu0 %v524
        %591 = vmatpush.bf16.msra.mxu0 %v520
        %592 = vmatmul.bf16.gmra.mxu0 %v408
        %v593 = vpop.f32.mrf.mxu0
        %v594 = vadd.f32 %v368, %v593
        %v595 = vpop.f32.mrf.mxu0
        %v596 = vadd.f32 %v368, %v595
        %597 = vmatmul.bf16.gmra.mxu0 %v409
        %v598 = vpop.f32.mrf.mxu0
        %v599 = vadd.f32 %v368, %v598
        %v600 = vpop.f32.mrf.mxu0
        %v601 = vadd.f32 %v368, %v600
        %602 = vmatmul.bf16.gmra.mxu0 %v410
        %v603 = vpop.f32.mrf.mxu0
        %v604 = vadd.f32 %v368, %v603
        %v605 = vpop.f32.mrf.mxu0
        %v606 = vadd.f32 %v368, %v605
        %607 = vmatmul.bf16.gmra.mxu0 %v411
        %v608 = vpop.f32.mrf.mxu0
        %v609 = vadd.f32 %v368, %v608
        %v610 = vpop.f32.mrf.mxu0
        %v611 = vadd.f32 %v368, %v610
        %612 = vmatmul.bf16.gmra.mxu0 %v412
        %v613 = vpop.f32.mrf.mxu0
        %v614 = vadd.f32 %v368, %v613
        %v615 = vpop.f32.mrf.mxu0
        %v616 = vadd.f32 %v368, %v615
        %617 = vmatmul.bf16.gmra.mxu0 %v413
        %v618 = vpop.f32.mrf.mxu0
        %v619 = vadd.f32 %v368, %v618
        %v620 = vpop.f32.mrf.mxu0
        %v621 = vadd.f32 %v368, %v620
        %622 = vmatmul.bf16.gmra.mxu0 %v414
        %v623 = vpop.f32.mrf.mxu0
        %v624 = vadd.f32 %v368, %v623
        %v625 = vpop.f32.mrf.mxu0
        %v626 = vadd.f32 %v368, %v625
        %627 = vmatmul.bf16.gmra.mxu0 %v415
        %v628 = vpop.f32.mrf.mxu0
        %v629 = vadd.f32 %v368, %v628
        %v630 = vpop.f32.mrf.mxu0
        %v631 = vadd.f32 %v368, %v630
        %632 = vdwg.mxu0
        %633 = vmatpush.bf16.msra.mxu0 %v549
        %634 = vmatpush.bf16.msra.mxu0 %v545
        %635 = vmatpush.bf16.msra.mxu0 %v541
        %636 = vmatpush.bf16.msra.mxu0 %v537
        %637 = vmatpush.bf16.msra.mxu0 %v533
        %638 = vmatpush.bf16.msra.mxu0 %v529
        %639 = vmatpush.bf16.msra.mxu0 %v525
        %640 = vmatpush.bf16.msra.mxu0 %v521
        %641 = vmatmul.bf16.gmra.mxu0 %v408
        %v642 = vpop.f32.mrf.mxu0
        %v643 = vadd.f32 %v369, %v642
        %v644 = vpop.f32.mrf.mxu0
        %v645 = vadd.f32 %v369, %v644
        %646 = vmatmul.bf16.gmra.mxu0 %v409
        %v647 = vpop.f32.mrf.mxu0
        %v648 = vadd.f32 %v369, %v647
        %v649 = vpop.f32.mrf.mxu0
        %v650 = vadd.f32 %v369, %v649
        %651 = vmatmul.bf16.gmra.mxu0 %v410
        %v652 = vpop.f32.mrf.mxu0
        %v653 = vadd.f32 %v369, %v652
        %v654 = vpop.f32.mrf.mxu0
        %v655 = vadd.f32 %v369, %v654
        %656 = vmatmul.bf16.gmra.mxu0 %v411
        %v657 = vpop.f32.mrf.mxu0
        %v658 = vadd.f32 %v369, %v657
        %v659 = vpop.f32.mrf.mxu0
        %v660 = vadd.f32 %v369, %v659
        %661 = vmatmul.bf16.gmra.mxu0 %v412
        %v662 = vpop.f32.mrf.mxu0
        %v663 = vadd.f32 %v369, %v662
        %v664 = vpop.f32.mrf.mxu0
        %v665 = vadd.f32 %v369, %v664
        %666 = vmatmul.bf16.gmra.mxu0 %v413
        %v667 = vpop.f32.mrf.mxu0
        %v668 = vadd.f32 %v369, %v667
        %v669 = vpop.f32.mrf.mxu0
        %v670 = vadd.f32 %v369, %v669
        %671 = vmatmul.bf16.gmra.mxu0 %v414
        %v672 = vpop.f32.mrf.mxu0
        %v673 = vadd.f32 %v369, %v672
        %v674 = vpop.f32.mrf.mxu0
        %v675 = vadd.f32 %v369, %v674
        %676 = vmatmul.bf16.gmra.mxu0 %v415
        %v677 = vpop.f32.mrf.mxu0
        %v678 = vadd.f32 %v369, %v677
        %v679 = vpop.f32.mrf.mxu0
        %v680 = vadd.f32 %v369, %v679
        %681 = vdwg.mxu0
        %682 = vmatpush.bf16.msra.mxu0 %v550
        %683 = vmatpush.bf16.msra.mxu0 %v546
        %684 = vmatpush.bf16.msra.mxu0 %v542
        %685 = vmatpush.bf16.msra.mxu0 %v538
        %686 = vmatpush.bf16.msra.mxu0 %v534
        %687 = vmatpush.bf16.msra.mxu0 %v530
        %688 = vmatpush.bf16.msra.mxu0 %v526
        %689 = vmatpush.bf16.msra.mxu0 %v522
        %690 = vmatmul.bf16.gmra.mxu0 %v408
        %v691 = vpop.f32.mrf.mxu0
        %v692 = vadd.f32 %v370, %v691
        %v693 = vpop.f32.mrf.mxu0
        %v694 = vadd.f32 %v370, %v693
        %695 = vmatmul.bf16.gmra.mxu0 %v409
        %v696 = vpop.f32.mrf.mxu0
        %v697 = vadd.f32 %v370, %v696
        %v698 = vpop.f32.mrf.mxu0
        %v699 = vadd.f32 %v370, %v698
        %700 = vmatmul.bf16.gmra.mxu0 %v410
        %v701 = vpop.f32.mrf.mxu0
        %v702 = vadd.f32 %v370, %v701
        %v703 = vpop.f32.mrf.mxu0
        %v704 = vadd.f32 %v370, %v703
        %705 = vmatmul.bf16.gmra.mxu0 %v411
        %v706 = vpop.f32.mrf.mxu0
        %v707 = vadd.f32 %v370, %v706
        %v708 = vpop.f32.mrf.mxu0
        %v709 = vadd.f32 %v370, %v708
        %710 = vmatmul.bf16.gmra.mxu0 %v412
        %v711 = vpop.f32.mrf.mxu0
        %v712 = vadd.f32 %v370, %v711
        %v713 = vpop.f32.mrf.mxu0
        %v714 = vadd.f32 %v370, %v713
        %715 = vmatmul.bf16.gmra.mxu0 %v413
        %v716 = vpop.f32.mrf.mxu0
        %v717 = vadd.f32 %v370, %v716
        %v718 = vpop.f32.mrf.mxu0
        %v719 = vadd.f32 %v370, %v718
        %720 = vmatmul.bf16.gmra.mxu0 %v414
        %v721 = vpop.f32.mrf.mxu0
        %v722 = vadd.f32 %v370, %v721
        %v723 = vpop.f32.mrf.mxu0
        %v724 = vadd.f32 %v370, %v723
        %725 = vmatmul.bf16.gmra.mxu0 %v415
        %v726 = vpop.f32.mrf.mxu0
        %v727 = vadd.f32 %v370, %v726
        %v728 = vpop.f32.mrf.mxu0
        %v729 = vadd.f32 %v370, %v728
        %730 = vdwg.mxu0
        %731 = vmatpush.bf16.msra.mxu0 %v551
        %732 = vmatpush.bf16.msra.mxu0 %v547
        %733 = vmatpush.bf16.msra.mxu0 %v543
        %734 = vmatpush.bf16.msra.mxu0 %v539
        %735 = vmatpush.bf16.msra.mxu0 %v535
        %736 = vmatpush.bf16.msra.mxu0 %v531
        %737 = vmatpush.bf16.msra.mxu0 %v527
        %738 = vmatpush.bf16.msra.mxu0 %v523
        %739 = vmatmul.bf16.gmra.mxu0 %v408
        %v740 = vpop.f32.mrf.mxu0
        %v741 = vadd.f32 %v371, %v740
        %v742 = vpop.f32.mrf.mxu0
        %v743 = vadd.f32 %v371, %v742
        %744 = vmatmul.bf16.gmra.mxu0 %v409
        %v745 = vpop.f32.mrf.mxu0
        %v746 = vadd.f32 %v371, %v745
        %v747 = vpop.f32.mrf.mxu0
        %v748 = vadd.f32 %v371, %v747
        %749 = vmatmul.bf16.gmra.mxu0 %v410
        %v750 = vpop.f32.mrf.mxu0
        %v751 = vadd.f32 %v371, %v750
        %v752 = vpop.f32.mrf.mxu0
        %v753 = vadd.f32 %v371, %v752
        %754 = vmatmul.bf16.gmra.mxu0 %v411
        %v755 = vpop.f32.mrf.mxu0
        %v756 = vadd.f32 %v371, %v755
        %v757 = vpop.f32.mrf.mxu0
        %v758 = vadd.f32 %v371, %v757
        %759 = vmatmul.bf16.gmra.mxu0 %v412
        %v760 = vpop.f32.mrf.mxu0
        %v761 = vadd.f32 %v371, %v760
        %v762 = vpop.f32.mrf.mxu0
        %v763 = vadd.f32 %v371, %v762
        %764 = vmatmul.bf16.gmra.mxu0 %v413
        %v765 = vpop.f32.mrf.mxu0
        %v766 = vadd.f32 %v371, %v765
        %v767 = vpop.f32.mrf.mxu0
        %v768 = vadd.f32 %v371, %v767
        %769 = vmatmul.bf16.gmra.mxu0 %v414
        %v770 = vpop.f32.mrf.mxu0
        %v771 = vadd.f32 %v371, %v770
        %v772 = vpop.f32.mrf.mxu0
        %v773 = vadd.f32 %v371, %v772
        %774 = vmatmul.bf16.gmra.mxu0 %v415
        %v775 = vpop.f32.mrf.mxu0
        %v776 = vadd.f32 %v371, %v775
        %v777 = vpop.f32.mrf.mxu0
        %v778 = vadd.f32 %v371, %v777
        %779 = vdwg.mxu0
        %v780 = vmax.f32 %v594, 0.0
        %v781 = vmax.f32 %v643, 0.0
        %v782 = vmax.f32 %v692, 0.0
        %v783 = vmax.f32 %v741, 0.0
        %v784 = vmax.f32 %v596, 0.0
        %v785 = vmax.f32 %v645, 0.0
        %v786 = vmax.f32 %v694, 0.0
        %v787 = vmax.f32 %v743, 0.0
        %v788 = vmax.f32 %v599, 0.0
        %v789 = vmax.f32 %v648, 0.0
        %v790 = vmax.f32 %v697, 0.0
        %v791 = vmax.f32 %v746, 0.0
        %v792 = vmax.f32 %v601, 0.0
        %v793 = vmax.f32 %v650, 0.0
        %v794 = vmax.f32 %v699, 0.0
        %v795 = vmax.f32 %v748, 0.0
        %v796 = vmax.f32 %v604, 0.0
        %v797 = vmax.f32 %v653, 0.0
        %v798 = vmax.f32 %v702, 0.0
        %v799 = vmax.f32 %v751, 0.0
        %v800 = vmax.f32 %v606, 0.0
        %v801 = vmax.f32 %v655, 0.0
        %v802 = vmax.f32 %v704, 0.0
        %v803 = vmax.f32 %v753, 0.0
        %v804 = vmax.f32 %v609, 0.0
        %v805 = vmax.f32 %v658, 0.0
        %v806 = vmax.f32 %v707, 0.0
        %v807 = vmax.f32 %v756, 0.0
        %v808 = vmax.f32 %v611, 0.0
        %v809 = vmax.f32 %v660, 0.0
        %v810 = vmax.f32 %v709, 0.0
        %v811 = vmax.f32 %v758, 0.0
        %v812 = vmax.f32 %v614, 0.0
        %v813 = vmax.f32 %v663, 0.0
        %v814 = vmax.f32 %v712, 0.0
        %v815 = vmax.f32 %v761, 0.0
        %v816 = vmax.f32 %v616, 0.0
        %v817 = vmax.f32 %v665, 0.0
        %v818 = vmax.f32 %v714, 0.0
        %v819 = vmax.f32 %v763, 0.0
        %v820 = vmax.f32 %v619, 0.0
        %v821 = vmax.f32 %v668, 0.0
        %v822 = vmax.f32 %v717, 0.0
        %v823 = vmax.f32 %v766, 0.0
        %v824 = vmax.f32 %v621, 0.0
        %v825 = vmax.f32 %v670, 0.0
        %v826 = vmax.f32 %v719, 0.0
        %v827 = vmax.f32 %v768, 0.0
        %v828 = vmax.f32 %v624, 0.0
        %v829 = vmax.f32 %v673, 0.0
        %v830 = vmax.f32 %v722, 0.0
        %v831 = vmax.f32 %v771, 0.0
        %v832 = vmax.f32 %v626, 0.0
        %v833 = vmax.f32 %v675, 0.0
        %v834 = vmax.f32 %v724, 0.0
        %v835 = vmax.f32 %v773, 0.0
        %v836 = vmax.f32 %v629, 0.0
        %v837 = vmax.f32 %v678, 0.0
        %v838 = vmax.f32 %v727, 0.0
        %v839 = vmax.f32 %v776, 0.0
        %v840 = vmax.f32 %v631, 0.0
        %v841 = vmax.f32 %v680, 0.0
        %v842 = vmax.f32 %v729, 0.0
        %v843 = vmax.f32 %v778, 0.0
        %v844 = vld [vmem:[#allocation2] sm:$0xf]
        %v845 = vadd.f32 %v780, %v784
        %v846 = vadd.f32 %v845, %v788
        %v847 = vadd.f32 %v846, %v792
        %v848 = vadd.f32 %v847, %v796
        %v849 = vadd.f32 %v848, %v800
        %v850 = vadd.f32 %v849, %v804
        %v851 = vadd.f32 %v850, %v808
        %v852 = vadd.f32 %v851, %v812
        %v853 = vadd.f32 %v852, %v816
        %v854 = vadd.f32 %v853, %v820
        %v855 = vadd.f32 %v854, %v824
        %v856 = vadd.f32 %v855, %v828
        %v857 = vadd.f32 %v856, %v832
        %v858 = vadd.f32 %v857, %v836
        %v859 = vadd.f32 %v858, %v840
        %v860 = vrot.slane %v859, 4
        %v861 = vadd.f32 %v859, %v860
        %v862 = vrot.slane %v861, 2
        %v863 = vadd.f32 %v861, %v862
        %v864 = vrot.slane %v863, 1
        %v865 = vadd.f32 %v863, %v864
        %v866 = vadd.f32 %v781, %v785
        %v867 = vadd.f32 %v866, %v789
        %v868 = vadd.f32 %v867, %v793
        %v869 = vadd.f32 %v868, %v797
        %v870 = vadd.f32 %v869, %v801
        %v871 = vadd.f32 %v870, %v805
        %v872 = vadd.f32 %v871, %v809
        %v873 = vadd.f32 %v872, %v813
        %v874 = vadd.f32 %v873, %v817
        %v875 = vadd.f32 %v874, %v821
        %v876 = vadd.f32 %v875, %v825
        %v877 = vadd.f32 %v876, %v829
        %v878 = vadd.f32 %v877, %v833
        %v879 = vadd.f32 %v878, %v837
        %v880 = vadd.f32 %v879, %v841
        %v881 = vrot.slane %v880, 4
        %v882 = vadd.f32 %v880, %v881
        %v883 = vrot.slane %v882, 2
        %v884 = vadd.f32 %v882, %v883
        %v885 = vrot.slane %v884, 1
        %v886 = vadd.f32 %v884, %v885
        %v887 = vadd.f32 %v782, %v786
        %v888 = vadd.f32 %v887, %v790
        %v889 = vadd.f32 %v888, %v794
        %v890 = vadd.f32 %v889, %v798
        %v891 = vadd.f32 %v890, %v802
        %v892 = vadd.f32 %v891, %v806
        %v893 = vadd.f32 %v892, %v810
        %v894 = vadd.f32 %v893, %v814
        %v895 = vadd.f32 %v894, %v818
        %v896 = vadd.f32 %v895, %v822
        %v897 = vadd.f32 %v896, %v826
        %v898 = vadd.f32 %v897, %v830
        %v899 = vadd.f32 %v898, %v834
        %v900 = vadd.f32 %v899, %v838
        %v901 = vadd.f32 %v900, %v842
        %v902 = vrot.slane %v901, 4
        %v903 = vadd.f32 %v901, %v902
        %v904 = vrot.slane %v903, 2
        %v905 = vadd.f32 %v903, %v904
        %v906 = vrot.slane %v905, 1
        %v907 = vadd.f32 %v905, %v906
        %v908 = vadd.f32 %v783, %v787
        %v909 = vadd.f32 %v908, %v791
        %v910 = vadd.f32 %v909, %v795
        %v911 = vadd.f32 %v910, %v799
        %v912 = vadd.f32 %v911, %v803
        %v913 = vadd.f32 %v912, %v807
        %v914 = vadd.f32 %v913, %v811
        %v915 = vadd.f32 %v914, %v815
        %v916 = vadd.f32 %v915, %v819
        %v917 = vadd.f32 %v916, %v823
        %v918 = vadd.f32 %v917, %v827
        %v919 = vadd.f32 %v918, %v831
        %v920 = vadd.f32 %v919, %v835
        %v921 = vadd.f32 %v920, %v839
        %v922 = vadd.f32 %v921, %v843
        %v923 = vrot.slane %v922, 4
        %v924 = vadd.f32 %v922, %v923
        %v925 = vrot.slane %v924, 2
        %v926 = vadd.f32 %v924, %v925
        %v927 = vrot.slane %v926, 1
        %v928 = vadd.f32 %v926, %v927
        %v933 = vrot.slane %v886, 7
        %v934 = vrot.slane %v907, 6
        %v935 = vrot.slane %v928, 5
        %vm936 = vcmask 1040384
        %v937 = vsel %vm936, %v865, %v933
        %vm938 = vcmask 1042434
        %v939 = vsel %vm938, %v934, %v935
        %vm940 = vcmask 1041408
        %v941 = vsel %vm940, %v937, %v939
        %v943 = vadd.f32 %v844, %v941
        %v944 = vlaneseq
        %vm945 = vcmp.ge.s32.totalorder %v944, 0
        %vm946 = vcmp.lt.s32.totalorder %v944, 512
        %vm947 = vmand %vm945, %vm946
        %948 = vst.msk [vmem:[#allocation2] sm:$0xf] %vm947, %v943
        %p949 = scmp.eq.s32.totalorder %s29, 1
        // Predicated region
        $region61: #{tpu_custom_call.1} parent=39 // pred_check
          %p950 = pneg %p949
        $region62: #{tpu_custom_call.1} parent=39 // pred_check_branch
          %952 = sbr.rel (%p950) target = $region64
        $region63: #{tpu_custom_call.1} parent=39 // pred_region
          %v953 = vld [vmem:[#allocation2] sm:$0xf]
          %v954 = vmul.f32 %v953, 0.00390625
          %v956 = vperm.slane %v954, 0
          %v957 = vperm.slane %v954, 1
          %v958 = vperm.slane %v954, 2
          %v959 = vperm.slane %v954, 3
          %v964 = vpack.c.bf16 %v956, %v956
          %v965 = vpack.c.bf16 %v957, %v957
          %v966 = vpack.c.bf16 %v958, %v958
          %v967 = vpack.c.bf16 %v959, %v959
          %v968 = vld [vmem:[#allocation9] sm:$0xf]
          %v969 = vld [vmem:[#allocation9 + $0x4] sm:$0xf]
          %v970 = vld [vmem:[#allocation9 + $0x8] sm:$0xf]
          %v971 = vld [vmem:[#allocation9 + $0xc] sm:$0xf]
          %v972 = vld [vmem:[#allocation9 + $0x10] sm:$0xf]
          %v973 = vld [vmem:[#allocation9 + $0x14] sm:$0xf]
          %v974 = vld [vmem:[#allocation9 + $0x18] sm:$0xf]
          %v975 = vld [vmem:[#allocation9 + $0x1c] sm:$0xf]
          %v976 = vld [vmem:[#allocation9 + $0x20] sm:$0xf]
          %v977 = vld [vmem:[#allocation9 + $0x24] sm:$0xf]
          %v978 = vld [vmem:[#allocation9 + $0x28] sm:$0xf]
          %v979 = vld [vmem:[#allocation9 + $0x2c] sm:$0xf]
          %v980 = vld [vmem:[#allocation9 + $0x30] sm:$0xf]
          %v981 = vld [vmem:[#allocation9 + $0x34] sm:$0xf]
          %v982 = vld [vmem:[#allocation9 + $0x38] sm:$0xf]
          %v983 = vld [vmem:[#allocation9 + $0x3c] sm:$0xf]
          %v984 = vld [vmem:[#allocation9 + $0x40] sm:$0xf]
          %v985 = vld [vmem:[#allocation9 + $0x44] sm:$0xf]
          %v986 = vld [vmem:[#allocation9 + $0x48] sm:$0xf]
          %v987 = vld [vmem:[#allocation9 + $0x4c] sm:$0xf]
          %v988 = vld [vmem:[#allocation9 + $0x50] sm:$0xf]
          %v989 = vld [vmem:[#allocation9 + $0x54] sm:$0xf]
          %v990 = vld [vmem:[#allocation9 + $0x58] sm:$0xf]
          %v991 = vld [vmem:[#allocation9 + $0x5c] sm:$0xf]
          %v992 = vld [vmem:[#allocation9 + $0x60] sm:$0xf]
          %v993 = vld [vmem:[#allocation9 + $0x64] sm:$0xf]
          %v994 = vld [vmem:[#allocation9 + $0x68] sm:$0xf]
          %v995 = vld [vmem:[#allocation9 + $0x6c] sm:$0xf]
          %v996 = vld [vmem:[#allocation9 + $0x70] sm:$0xf]
          %v997 = vld [vmem:[#allocation9 + $0x74] sm:$0xf]
          %v998 = vld [vmem:[#allocation9 + $0x78] sm:$0xf]
          %v999 = vld [vmem:[#allocation9 + $0x7c] sm:$0xf]
          %v1000 = vld [vmem:[#allocation9 + $0x80] sm:$0xf]
          %v1001 = vld [vmem:[#allocation9 + $0x84] sm:$0xf]
          %v1002 = vld [vmem:[#allocation9 + $0x88] sm:$0xf]
          %v1003 = vld [vmem:[#allocation9 + $0x8c] sm:$0xf]
          %v1004 = vld [vmem:[#allocation9 + $0x90] sm:$0xf]
          %v1005 = vld [vmem:[#allocation9 + $0x94] sm:$0xf]
          %v1006 = vld [vmem:[#allocation9 + $0x98] sm:$0xf]
          %v1007 = vld [vmem:[#allocation9 + $0x9c] sm:$0xf]
          %v1008 = vld [vmem:[#allocation9 + $0xa0] sm:$0xf]
          %v1009 = vld [vmem:[#allocation9 + $0xa4] sm:$0xf]
          %v1010 = vld [vmem:[#allocation9 + $0xa8] sm:$0xf]
          %v1011 = vld [vmem:[#allocation9 + $0xac] sm:$0xf]
          %v1012 = vld [vmem:[#allocation9 + $0xb0] sm:$0xf]
          %v1013 = vld [vmem:[#allocation9 + $0xb4] sm:$0xf]
          %v1014 = vld [vmem:[#allocation9 + $0xb8] sm:$0xf]
          %v1015 = vld [vmem:[#allocation9 + $0xbc] sm:$0xf]
          %v1016 = vld [vmem:[#allocation9 + $0xc0] sm:$0xf]
          %v1017 = vld [vmem:[#allocation9 + $0xc4] sm:$0xf]
          %v1018 = vld [vmem:[#allocation9 + $0xc8] sm:$0xf]
          %v1019 = vld [vmem:[#allocation9 + $0xcc] sm:$0xf]
          %v1020 = vld [vmem:[#allocation9 + $0xd0] sm:$0xf]
          %v1021 = vld [vmem:[#allocation9 + $0xd4] sm:$0xf]
          %v1022 = vld [vmem:[#allocation9 + $0xd8] sm:$0xf]
          %v1023 = vld [vmem:[#allocation9 + $0xdc] sm:$0xf]
          %v1024 = vld [vmem:[#allocation9 + $0xe0] sm:$0xf]
          %v1025 = vld [vmem:[#allocation9 + $0xe4] sm:$0xf]
          %v1026 = vld [vmem:[#allocation9 + $0xe8] sm:$0xf]
          %v1027 = vld [vmem:[#allocation9 + $0xec] sm:$0xf]
          %v1028 = vld [vmem:[#allocation9 + $0xf0] sm:$0xf]
          %v1029 = vld [vmem:[#allocation9 + $0xf4] sm:$0xf]
          %v1030 = vld [vmem:[#allocation9 + $0xf8] sm:$0xf]
          %v1031 = vld [vmem:[#allocation9 + $0xfc] sm:$0xf]
          %v1032 = vld [vmem:[%s4] sm:$0x1]
          %v1097 = vunpack.c.l.b16 %v968
          %v1098 = vunpack.c.l.b16 %v969
          %v1099 = vunpack.c.l.b16 %v970
          %v1100 = vunpack.c.l.b16 %v971
          %v1101 = vunpack.c.l.b16 %v972
          %v1102 = vunpack.c.l.b16 %v973
          %v1103 = vunpack.c.l.b16 %v974
          %v1104 = vunpack.c.l.b16 %v975
          %v1105 = vunpack.c.l.b16 %v976
          %v1106 = vunpack.c.l.b16 %v977
          %v1107 = vunpack.c.l.b16 %v978
          %v1108 = vunpack.c.l.b16 %v979
          %v1109 = vunpack.c.l.b16 %v980
          %v1110 = vunpack.c.l.b16 %v981
          %v1111 = vunpack.c.l.b16 %v982
          %v1112 = vunpack.c.l.b16 %v983
          %v1113 = vunpack.c.l.b16 %v984
          %v1114 = vunpack.c.l.b16 %v985
          %v1115 = vunpack.c.l.b16 %v986
          %v1116 = vunpack.c.l.b16 %v987
          %v1117 = vunpack.c.l.b16 %v988
          %v1118 = vunpack.c.l.b16 %v989
          %v1119 = vunpack.c.l.b16 %v990
          %v1120 = vunpack.c.l.b16 %v991
          %v1121 = vunpack.c.l.b16 %v992
          %v1122 = vunpack.c.l.b16 %v993
          %v1123 = vunpack.c.l.b16 %v994
          %v1124 = vunpack.c.l.b16 %v995
          %v1125 = vunpack.c.l.b16 %v996
          %v1126 = vunpack.c.l.b16 %v997
          %v1127 = vunpack.c.l.b16 %v998
          %v1128 = vunpack.c.l.b16 %v999
          %v1129 = vunpack.c.l.b16 %v1000
          %v1130 = vunpack.c.l.b16 %v1001
          %v1131 = vunpack.c.l.b16 %v1002
          %v1132 = vunpack.c.l.b16 %v1003
          %v1133 = vunpack.c.l.b16 %v1004
          %v1134 = vunpack.c.l.b16 %v1005
          %v1135 = vunpack.c.l.b16 %v1006
          %v1136 = vunpack.c.l.b16 %v1007
          %v1137 = vunpack.c.l.b16 %v1008
          %v1138 = vunpack.c.l.b16 %v1009
          %v1139 = vunpack.c.l.b16 %v1010
          %v1140 = vunpack.c.l.b16 %v1011
          %v1141 = vunpack.c.l.b16 %v1012
          %v1142 = vunpack.c.l.b16 %v1013
          %v1143 = vunpack.c.l.b16 %v1014
          %v1144 = vunpack.c.l.b16 %v1015
          %v1145 = vunpack.c.l.b16 %v1016
          %v1146 = vunpack.c.l.b16 %v1017
          %v1147 = vunpack.c.l.b16 %v1018
          %v1148 = vunpack.c.l.b16 %v1019
          %v1149 = vunpack.c.l.b16 %v1020
          %v1150 = vunpack.c.l.b16 %v1021
          %v1151 = vunpack.c.l.b16 %v1022
          %v1152 = vunpack.c.l.b16 %v1023
          %v1153 = vunpack.c.l.b16 %v1024
          %v1154 = vunpack.c.l.b16 %v1025
          %v1155 = vunpack.c.l.b16 %v1026
          %v1156 = vunpack.c.l.b16 %v1027
          %v1157 = vunpack.c.l.b16 %v1028
          %v1158 = vunpack.c.l.b16 %v1029
          %v1159 = vunpack.c.l.b16 %v1030
          %v1160 = vunpack.c.l.b16 %v1031
          %v1161 = vpack.c.b16 %v1098, %v1097
          %v1162 = vpack.c.b16 %v1100, %v1099
          %v1163 = vpack.c.b16 %v1102, %v1101
          %v1164 = vpack.c.b16 %v1104, %v1103
          %v1165 = vpack.c.b16 %v1106, %v1105
          %v1166 = vpack.c.b16 %v1108, %v1107
          %v1167 = vpack.c.b16 %v1110, %v1109
          %v1168 = vpack.c.b16 %v1112, %v1111
          %v1169 = vpack.c.b16 %v1114, %v1113
          %v1170 = vpack.c.b16 %v1116, %v1115
          %v1171 = vpack.c.b16 %v1118, %v1117
          %v1172 = vpack.c.b16 %v1120, %v1119
          %v1173 = vpack.c.b16 %v1122, %v1121
          %v1174 = vpack.c.b16 %v1124, %v1123
          %v1175 = vpack.c.b16 %v1126, %v1125
          %v1176 = vpack.c.b16 %v1128, %v1127
          %v1177 = vpack.c.b16 %v1130, %v1129
          %v1178 = vpack.c.b16 %v1132, %v1131
          %v1179 = vpack.c.b16 %v1134, %v1133
          %v1180 = vpack.c.b16 %v1136, %v1135
          %v1181 = vpack.c.b16 %v1138, %v1137
          %v1182 = vpack.c.b16 %v1140, %v1139
          %v1183 = vpack.c.b16 %v1142, %v1141
          %v1184 = vpack.c.b16 %v1144, %v1143
          %v1185 = vpack.c.b16 %v1146, %v1145
          %v1186 = vpack.c.b16 %v1148, %v1147
          %v1187 = vpack.c.b16 %v1150, %v1149
          %v1188 = vpack.c.b16 %v1152, %v1151
          %v1189 = vpack.c.b16 %v1154, %v1153
          %v1190 = vpack.c.b16 %v1156, %v1155
          %v1191 = vpack.c.b16 %v1158, %v1157
          %v1192 = vpack.c.b16 %v1160, %v1159
          %1225 = vmatpush.bf16.msra.mxu0 %v1168
          %1226 = vmatpush.bf16.msra.mxu0 %v1167
          %1227 = vmatpush.bf16.msra.mxu0 %v1166
          %1228 = vmatpush.bf16.msra.mxu0 %v1165
          %1229 = vmatpush.bf16.msra.mxu0 %v1164
          %1230 = vmatpush.bf16.msra.mxu0 %v1163
          %1231 = vmatpush.bf16.msra.mxu0 %v1162
          %1232 = vmatpush.bf16.msra.mxu0 %v1161
          %1233 = vmatmul.bf16.gmra.mxu0 %v964
          %v1234 = vpop.f32.mrf.mxu0
          %v1235 = vadd.f32 %v1032, %v1234
          %v1236 = vpop.f32.mrf.mxu0
          %1237 = vdwg.mxu0
          %1238 = vmatpush.bf16.msra.mxu0 %v1176
          %1239 = vmatpush.bf16.msra.mxu0 %v1175
          %1240 = vmatpush.bf16.msra.mxu0 %v1174
          %1241 = vmatpush.bf16.msra.mxu0 %v1173
          %1242 = vmatpush.bf16.msra.mxu0 %v1172
          %1243 = vmatpush.bf16.msra.mxu0 %v1171
          %1244 = vmatpush.bf16.msra.mxu0 %v1170
          %1245 = vmatpush.bf16.msra.mxu0 %v1169
          %1246 = vmatmul.bf16.gmra.mxu0 %v965
          %v1247 = vpop.f32.mrf.mxu0
          %v1248 = vadd.f32 %v1235, %v1247
          %v1249 = vpop.f32.mrf.mxu0
          %1250 = vdwg.mxu0
          %1251 = vmatpush.bf16.msra.mxu0 %v1184
          %1252 = vmatpush.bf16.msra.mxu0 %v1183
          %1253 = vmatpush.bf16.msra.mxu0 %v1182
          %1254 = vmatpush.bf16.msra.mxu0 %v1181
          %1255 = vmatpush.bf16.msra.mxu0 %v1180
          %1256 = vmatpush.bf16.msra.mxu0 %v1179
          %1257 = vmatpush.bf16.msra.mxu0 %v1178
          %1258 = vmatpush.bf16.msra.mxu0 %v1177
          %1259 = vmatmul.bf16.gmra.mxu0 %v966
          %v1260 = vpop.f32.mrf.mxu0
          %v1261 = vadd.f32 %v1248, %v1260
          %v1262 = vpop.f32.mrf.mxu0
          %1263 = vdwg.mxu0
          %1264 = vmatpush.bf16.msra.mxu0 %v1192
          %1265 = vmatpush.bf16.msra.mxu0 %v1191
          %1266 = vmatpush.bf16.msra.mxu0 %v1190
          %1267 = vmatpush.bf16.msra.mxu0 %v1189
          %1268 = vmatpush.bf16.msra.mxu0 %v1188
          %1269 = vmatpush.bf16.msra.mxu0 %v1187
          %1270 = vmatpush.bf16.msra.mxu0 %v1186
          %1271 = vmatpush.bf16.msra.mxu0 %v1185
          %1272 = vmatmul.bf16.gmra.mxu0 %v967
          %v1273 = vpop.f32.mrf.mxu0
          %v1274 = vadd.f32 %v1261, %v1273
          %v1275 = vpop.f32.mrf.mxu0
          %1276 = vdwg.mxu0
          %1277 = vst [vmem:[%s307] sm:$0x1] %v1274
        $region64: #{tpu_custom_call.1} parent=39 // pred_fallthru
          _
        %s1278 = sand.u32 %s156, 1
        %s1279 = scalar_lea.sflag [#allocation5], %s1278
        %s1280 = sand.u32 %s156, 1
        %s1281 = scalar_lea.vmem [#allocation11], %s1280
        // Predicated region
        $region65: #{tpu_custom_call.1} parent=39 // pred_check
          %p1282 = pneg %p166
        $region66: #{tpu_custom_call.1} parent=39 // pred_check_branch
          %1284 = sbr.rel (%p1282) target = $region68
        $region67: #{tpu_custom_call.1} parent=39 // pred_region
          %1286 = vsyncadd %s1279, 0
          %s1287 = scalar_lea.hbm %s5, %s28
          %s1289 = sshll.u32 %s1281, 4
          %s1290 = int_to_ptr.vmem [resolvable:$true] %s1289
          %s1291 = sshll.u32 %s1287, 4
          %s1292 = int_to_ptr.hbm [resolvable:$true] %s1291
          %1294 = dma.vmem_to_hbm [thread:$0]  %s1290, 16, %s1292, %s1279
        $region68: #{tpu_custom_call.1} parent=39 // pred_fallthru
          _
      $region40: #{tpu_custom_call.1} parent=5 // pred_fallthru
        _
      %p1295 = scmp.le.s32.totalorder 2, %s19
      // Predicated region
      $region69: #{tpu_custom_call.1} parent=5 // pred_check
        %p1296 = pneg %p1295
      $region70: #{tpu_custom_call.1} parent=5 // pred_check_branch
        %1298 = sbr.rel (%p1296) target = $region72
      $region71: #{tpu_custom_call.1} parent=5 // pred_region
        %s1299 = ssub.s32 %s19, 2
        // Predicated region
        $region73: #{tpu_custom_call.1} parent=71 // pred_check
          %p1300 = pneg %p172
        $region74: #{tpu_custom_call.1} parent=71 // pred_check_branch
          %1302 = sbr.rel (%p1300) target = $region76
        $region75: #{tpu_custom_call.1} parent=71 // pred_region
          %s1303 = sand.u32 %s157, 1
          %s1304 = scalar_lea.sflag [#allocation5], %s1303
          %s1305 = sand.u32 %s157, 1
          %s1306 = scalar_lea.vmem [#allocation11], %s1305
          %1308 = dma.done %s1304, 16
        $region76: #{tpu_custom_call.1} parent=71 // pred_fallthru
          _
      $region72: #{tpu_custom_call.1} parent=5 // pred_fallthru
        _
    $region6: #{tpu_custom_call.1} parent=1 // loop_footer
      %s23 = sadd.s32 1, %s19
    $region7: #{tpu_custom_call.1} parent=1 // loop_footer_branch
      %18 = sbr.rel target = $region3
    $region8: #{tpu_custom_call.1} parent=1 // loop_exit
      _
    %1309 = vsyncpa [#allocation4], 1
    %s1310 = scalar_lea.sflag [#allocation4], 1
    %1311 = vsyncpa %s1310, 1
    %1312 = vsyncpa [#allocation7], 1
    %1313 = vsyncpa [#allocation10], 1
    %1314 = vsyncpa [#allocation5], 1
    %s1315 = scalar_lea.sflag [#allocation5], 1
    %1316 = vsyncpa %s1315, 1

</llo_original>
